<compile_context>
chip_gen: v7x
topology: tpu7x:2x2x1
jax: 0.10.0
libtpu: 0.0.40
codegen_flags: <defaults>
</compile_context>

<pallas_src>
import functools

import jax
import jax.numpy as jnp
from jax.experimental import pallas as pl
from jax.experimental.pallas import tpu as pltpu


def _round_up(x, m):
    return (x + m - 1) // m * m


def _patch_embed_kernel(x_ref, w_ref, p_ref, o_ref, *, e_real):
    """One row-tile: bf16 projection matmul (f32 acc) + bias + LayerNorm."""
    x = x_ref[...]                               # (TM, Kp)  compute dtype
    w = w_ref[...]                               # (Kp, Ep)  compute dtype
    params = p_ref[...].astype(jnp.float32)      # (3, Ep)   [bias; gamma; beta]
    bias = params[0:1]
    gamma = params[1:2]
    beta = params[2:3]

    # MXU matmul with f32 accumulation; bias add in f32.
    y = jnp.dot(x, w, preferred_element_type=jnp.float32) + bias   # (TM, Ep)

    e_pad = y.shape[-1]
    inv_e = 1.0 / e_real
    if e_pad != e_real:
        # Padded columns of y are exactly zero (zero weight cols / zero bias),
        # so sums over the full lane width equal sums over the real columns.
        col = jax.lax.broadcasted_iota(jnp.int32, (1, e_pad), 1)
        mask = (col < e_real).astype(jnp.float32)
        mean = jnp.sum(y, axis=-1, keepdims=True) * inv_e
        centered = (y - mean) * mask             # zero out padded cols
        var = jnp.sum(centered * centered, axis=-1, keepdims=True) * inv_e
    else:
        mean = jnp.sum(y, axis=-1, keepdims=True) * inv_e
        centered = y - mean
        var = jnp.sum(centered * centered, axis=-1, keepdims=True) * inv_e

    inv_std = jax.lax.rsqrt(var + 1e-5)          # nn.LayerNorm default eps
    # gamma/beta are zero in padded cols, so padded outputs are exactly 0.
    o_ref[...] = (centered * (inv_std * gamma) + beta).astype(o_ref.dtype)


def patch_embedding(x, conv_w, conv_b, ln_w, ln_b, *, patch_size,
                    tile_m=512, compute_dtype=jnp.bfloat16):
    """x: (B, C, H, W) NCHW.  Returns (B, num_patches, embed_dim)."""
    B, C, H, W = x.shape
    p = patch_size
    E = conv_w.shape[0]
    assert H % p == 0 and W % p == 0
    hp, wp = H // p, W // p
    num_patches = hp * wp
    K = C * p * p
    M = B * num_patches

    # --- glue: patchify NCHW -> (M, K), channel-major patch; cast to bf16
    # first so the layout pass moves half the bytes. ---
    xc = x.astype(compute_dtype)
    xp = xc.reshape(B, C, hp, p, wp, p)
    xp = xp.transpose(0, 2, 4, 1, 3, 5).reshape(M, K)        # (M, K)

    # Lane-dense padding (multiples of 128 on minor dims) + row padding so the
    # grid is a clean division with large tiles.
    K_pad = _round_up(K, 128)
    E_pad = _round_up(E, 128)
    tile = min(tile_m, _round_up(M, 8))                      # tile <= problem
    M_pad = _round_up(M, tile)

    if M_pad != M or K_pad != K:
        xp = jnp.pad(xp, ((0, M_pad - M), (0, K_pad - K)))

    # Conv2d weight (E, C, p, p) -> dense (K, E); same flattening order.
    w_mat = conv_w.reshape(E, K).T.astype(compute_dtype)     # (K, E)
    if K_pad != K or E_pad != E:
        w_mat = jnp.pad(w_mat, ((0, K_pad - K), (0, E_pad - E)))

    # Collapse bias / gamma / beta into a single small f32 operand.
    params = jnp.stack([conv_b, ln_w, ln_b]).astype(jnp.float32)   # (3, E)
    if E_pad != E:
        params = jnp.pad(params, ((0, 0), (0, E_pad - E)))

    grid = (M_pad // tile,)
    kernel = functools.partial(_patch_embed_kernel, e_real=E)

    in_item = jnp.dtype(compute_dtype).itemsize
    out_item = jnp.dtype(x.dtype).itemsize
    cost = pl.CostEstimate(
        flops=2 * M * K * E + 6 * M * E,          # matmul + LN elementwise
        transcendentals=M,                        # one rsqrt per row
        bytes_accessed=(M_pad * K_pad * in_item   # patches in
                        + K_pad * E_pad * in_item # weight in
                        + 3 * E_pad * 4           # params in
                        + M_pad * E_pad * out_item))  # out

    out = pl.pallas_call(
        kernel,
        out_shape=jax.ShapeDtypeStruct((M_pad, E_pad), x.dtype),
        grid_spec=pltpu.PrefetchScalarGridSpec(
            num_scalar_prefetch=0,
            grid=grid,
            in_specs=[
                pl.BlockSpec((tile, K_pad), lambda i: (i, 0)),    # patch rows
                pl.BlockSpec((K_pad, E_pad), lambda i: (0, 0)),   # projection W
                pl.BlockSpec((3, E_pad), lambda i: (0, 0)),       # bias/gamma/beta
            ],
            out_specs=pl.BlockSpec((tile, E_pad), lambda i: (i, 0)),
        ),
        compiler_params=pltpu.CompilerParams(
            dimension_semantics=("parallel",),
            vmem_limit_bytes=32 * 1024 * 1024,
        ),
        cost_estimate=cost,
    )(xp, w_mat, params)

    # Only un-pad when padding was actually applied (skip an extra HBM pass
    # on aligned problems).
    if M_pad != M or E_pad != E:
        out = out[:M, :E]
    return out.reshape(B, num_patches, E)


if __name__ == "__main__":
    # Small shapes consistent with the module's forward semantics.
    B, C, H, W = 2, 4, 16, 16
    patch_size = 2
    embed_dim = 32

    key = jax.random.PRNGKey(0)
    k_x, k_w, k_b, k_g, k_be = jax.random.split(key, 5)

    x = jax.random.normal(k_x, (B, C, H, W), dtype=jnp.float32)

    # Deterministic parameter init (shapes per nn.Conv2d / nn.LayerNorm).
    fan_in = C * patch_size * patch_size
    bound = 1.0 / (fan_in ** 0.5)
    conv_w = jax.random.uniform(
        k_w, (embed_dim, C, patch_size, patch_size),
        minval=-bound, maxval=bound, dtype=jnp.float32)
    conv_b = jax.random.uniform(
        k_b, (embed_dim,), minval=-bound, maxval=bound, dtype=jnp.float32)
    ln_w = 1.0 + 0.1 * jax.random.normal(k_g, (embed_dim,), dtype=jnp.float32)
    ln_b = 0.1 * jax.random.normal(k_be, (embed_dim,), dtype=jnp.float32)

    out = patch_embedding(x, conv_w, conv_b, ln_w, ln_b, patch_size=patch_size)
    jax.block_until_ready(out)

    # Reference in plain JAX, using the same bf16 cast of the matmul operands
    # (LayerNorm math in f32), so it matches the kernel's numerics.
    p = patch_size
    hp, wp = H // p, W // p
    xp = x.reshape(B, C, hp, p, wp, p).transpose(0, 2, 4, 1, 3, 5)
    xp = xp.reshape(B * hp * wp, C * p * p)
    xp_c = xp.astype(jnp.bfloat16).astype(jnp.float32)
    w_c = conv_w.reshape(embed_dim, -1).T.astype(jnp.bfloat16).astype(jnp.float32)
    y = xp_c @ w_c + conv_b
    mean = y.mean(-1, keepdims=True)
    var = ((y - mean) ** 2).mean(-1, keepdims=True)
    ref = (y - mean) / jnp.sqrt(var + 1e-5) * ln_w + ln_b
    ref = ref.reshape(B, hp * wp, embed_dim)

    assert out.shape == (B, (H // p) * (W // p), embed_dim)
    assert jnp.allclose(out, ref, atol=2e-4, rtol=2e-4), "mismatch vs reference"
    print("KERNEL_OK")
</pallas_src>

<mosaic_0001>
module attributes {stable_mosaic.version = 11 : i64} {
  func.func @_patch_embed_kernel(%arg0: i32, %arg1: memref<128x128xbf16, #tpu.memory_space<vmem>>, %arg2: memref<128x128xbf16, #tpu.memory_space<vmem>>, %arg3: memref<3x128xf32, #tpu.memory_space<vmem>>, %arg4: memref<128x128xf32, #tpu.memory_space<vmem>>) attributes {dimension_semantics = [#tpu.dimension_semantics<parallel>], iteration_bounds = array<i64: 1>, scalar_prefetch = 0 : i64, scratch_operands = 0 : i64, tpu.core_type = #tpu.core_type<tc>, window_params = [{transform_indices = @transform_0, window_bounds = array<i64: 128, 128>}, {pipeline_mode = #tpu.pipeline_mode<synchronous>, transform_indices = @transform_1, window_bounds = array<i64: 128, 128>}, {pipeline_mode = #tpu.pipeline_mode<synchronous>, transform_indices = @transform_2, window_bounds = array<i64: 3, 128>}, {transform_indices = @transform_3, window_bounds = array<i64: 128, 128>}]} {
    %c0 = arith.constant 0 : index
    %c0_0 = arith.constant 0 : index
    %0 = vector.load %arg1[%c0, %c0_0] : memref<128x128xbf16, #tpu.memory_space<vmem>>, vector<128x128xbf16>
    %c0_1 = arith.constant 0 : index
    %c0_2 = arith.constant 0 : index
    %1 = vector.load %arg2[%c0_1, %c0_2] : memref<128x128xbf16, #tpu.memory_space<vmem>>, vector<128x128xbf16>
    %c0_3 = arith.constant 0 : index
    %c0_4 = arith.constant 0 : index
    %2 = vector.load %arg3[%c0_3, %c0_4] : memref<3x128xf32, #tpu.memory_space<vmem>>, vector<3x128xf32>
    %3 = vector.extract_strided_slice %2 {offsets = [0, 0], sizes = [1, 128], strides = [1, 1]} : vector<3x128xf32> to vector<1x128xf32>
    %4 = vector.extract_strided_slice %2 {offsets = [1, 0], sizes = [1, 128], strides = [1, 1]} : vector<3x128xf32> to vector<1x128xf32>
    %5 = vector.extract_strided_slice %2 {offsets = [2, 0], sizes = [1, 128], strides = [1, 1]} : vector<3x128xf32> to vector<1x128xf32>
    %cst = arith.constant dense<0.000000e+00> : vector<128x128xf32>
    %6 = tpu.matmul %0, %1, %cst {dimension_numbers = #tpu.dot_dimension_numbers<[1], [0], [0], [1], [0, 0, 1, 1], [], []>} : vector<128x128xbf16>, vector<128x128xbf16>, vector<128x128xf32> -> vector<128x128xf32>
    %7 = vector.broadcast %3 : vector<1x128xf32> to vector<128x128xf32>
    %8 = arith.addf %6, %7 : vector<128x128xf32>
    %9 = tpu.iota {dimensions = array<i32: 1>} : vector<1x128xi32>
    %c32_i32 = arith.constant 32 : i32
    %10 = vector.broadcast %c32_i32 : i32 to vector<1x128xi32>
    %11 = arith.cmpi slt, %9, %10 : vector<1x128xi32>
    %12 = arith.extui %11 : vector<1x128xi1> to vector<1x128xi32>
    %13 = arith.sitofp %12 : vector<1x128xi32> to vector<1x128xf32>
    %cst_5 = arith.constant dense<0.000000e+00> : vector<128xf32>
    %14 = vector.multi_reduction <add>, %8, %cst_5 [1] : vector<128x128xf32> to vector<128xf32>
    %15 = vector.shape_cast %14 : vector<128xf32> to vector<128x1xf32>
    %cst_6 = arith.constant 3.125000e-02 : f32
    %16 = vector.broadcast %cst_6 : f32 to vector<128x1xf32>
    %17 = arith.mulf %15, %16 : vector<128x1xf32>
    %18 = vector.broadcast %17 : vector<128x1xf32> to vector<128x128xf32>
    %19 = arith.subf %8, %18 : vector<128x128xf32>
    %20 = vector.broadcast %13 : vector<1x128xf32> to vector<128x128xf32>
    %21 = arith.mulf %19, %20 : vector<128x128xf32>
    %22 = arith.mulf %21, %21 : vector<128x128xf32>
    %cst_7 = arith.constant dense<0.000000e+00> : vector<128xf32>
    %23 = vector.multi_reduction <add>, %22, %cst_7 [1] : vector<128x128xf32> to vector<128xf32>
    %24 = vector.shape_cast %23 : vector<128xf32> to vector<128x1xf32>
    %cst_8 = arith.constant 3.125000e-02 : f32
    %25 = vector.broadcast %cst_8 : f32 to vector<128x1xf32>
    %26 = arith.mulf %24, %25 : vector<128x1xf32>
    %cst_9 = arith.constant 9.99999974E-6 : f32
    %27 = vector.broadcast %cst_9 : f32 to vector<128x1xf32>
    %28 = arith.addf %26, %27 : vector<128x1xf32>
    %29 = math.rsqrt %28 : vector<128x1xf32>
    %30 = vector.broadcast %29 : vector<128x1xf32> to vector<128x128xf32>
    %31 = vector.broadcast %4 : vector<1x128xf32> to vector<128x128xf32>
    %32 = arith.mulf %30, %31 : vector<128x128xf32>
    %33 = arith.mulf %21, %32 : vector<128x128xf32>
    %34 = vector.broadcast %5 : vector<1x128xf32> to vector<128x128xf32>
    %35 = arith.addf %33, %34 : vector<128x128xf32>
    %c0_10 = arith.constant 0 : index
    %c0_11 = arith.constant 0 : index
    %36 = vector.load %arg4[%c0_10, %c0_11] : memref<128x128xf32, #tpu.memory_space<vmem>>, vector<128x128xf32>
    tpu.vector_store %arg4[%c0_10, %c0_11], %35 {strides = array<i32>} : memref<128x128xf32, #tpu.memory_space<vmem>>, vector<128x128xf32>,
    return
  }
  func.func @transform_0(%arg0: i32) -> (i32, i32) {
    %c0_i32 = arith.constant 0 : i32
    %c0_i32_0 = arith.constant 0 : i32
    return %arg0, %c0_i32 : i32, i32
  }
  func.func @transform_1(%arg0: i32) -> (i32, i32) {
    %c0_i32 = arith.constant 0 : i32
    %c0_i32_0 = arith.constant 0 : i32
    %c0_i32_1 = arith.constant 0 : i32
    return %c0_i32, %c0_i32_0 : i32, i32
  }
  func.func @transform_2(%arg0: i32) -> (i32, i32) {
    %c0_i32 = arith.constant 0 : i32
    %c0_i32_0 = arith.constant 0 : i32
    %c0_i32_1 = arith.constant 0 : i32
    return %c0_i32, %c0_i32_0 : i32, i32
  }
  func.func @transform_3(%arg0: i32) -> (i32, i32) {
    %c0_i32 = arith.constant 0 : i32
    %c0_i32_0 = arith.constant 0 : i32
    return %arg0, %c0_i32 : i32, i32
  }
}

</mosaic_0001>

<llo_original>
// kernel: tpu_custom_call.1
$region0: #{tpu_custom_call.1}
  #allocation0 [shape = 'u32[]', space=smem, size = 0x4, offset = 0x4, fixed_abs, tag = 'smem constant byte address 0x4 - core index']
  #allocation1 [shape = 'u32[144,128]{1,0:T(1,128)}', space=vmem, size = 0x12000, scoped, tag = 'internal scratch']
  %s0 = inlined_call_operand.hbm [shape: bf16[128,128], index: 0, kind: input, shape index: {}]
  %s1 = inlined_call_operand.hbm [shape: bf16[128,128], index: 1, kind: input, shape index: {}]
  %s2 = inlined_call_operand.vmem [shape: f32[3,128], index: 2, kind: input, shape index: {}]
  %s3 = inlined_call_operand.hbm [shape: f32[128,128], index: 3, kind: output, shape index: {}]
  %s4 = sld [smem:[#allocation0]]
  $region30: #{tpu_custom_call.1} parent=0
    _
  %s6 = ssub.s32 1, %s4
  %s7 = scalar_select 0, %s6, %s4
  $region1: #{tpu_custom_call.1} parent=0
    #allocation2 [shape = 'u8[32768]{0}', space=vmem, size = 0x8000, scoped, tag = 'input window, operand 0, single buffered']
    #allocation3 [shape = 's32[1]{0}', space=sflag, size = 0x4, scoped, tag = 'scoped memory for tpu_custom_call.1']
    #allocation4 [shape = 's32[1]{0}', space=sflag, size = 0x4, scoped, tag = 'scoped memory for tpu_custom_call.1']
    #allocation5 [shape = 'u8[32768]{0}', space=vmem, size = 0x8000, scoped, tag = 'input window, operand 1, single buffered']
    #allocation6 [shape = 's32[1]{0}', space=sflag, size = 0x4, scoped, tag = 'scoped memory for tpu_custom_call.1']
    #allocation7 [shape = 'u8[65536]{0}', space=vmem, size = 0x10000, scoped, tag = 'output window, operand 0, single buffered']
    %8 = vsyncpa [#allocation3], 0
    %9 = vsyncpa [#allocation6], 0
    %10 = vsyncpa [#allocation4], 0
    // Predicated region
    $region2: #{tpu_custom_call.1} parent=1 // pred_check
      _
    $region3: #{tpu_custom_call.1} parent=1 // pred_check_branch
      %12 = sbr.rel (0) target = $region5
    $region4: #{tpu_custom_call.1} parent=1 // pred_region
      %s14 = ssub.s32 1024, 1024
      %15 = vsyncadd [#allocation3], %s14
      %s16 = sshll.u32 [#allocation2], 4
      %s17 = int_to_ptr.vmem [resolvable:$true] %s16
      %22 = dma.hbm_to_vmem [thread:$0]  %s0, 1024, %s17, [#allocation3], 64, 64, 4
    $region5: #{tpu_custom_call.1} parent=1 // pred_fallthru
      _
    // Predicated region
    $region6: #{tpu_custom_call.1} parent=1 // pred_check
      _
    $region7: #{tpu_custom_call.1} parent=1 // pred_check_branch
      %24 = sbr.rel (0) target = $region9
    $region8: #{tpu_custom_call.1} parent=1 // pred_region
      %s26 = ssub.s32 1024, 1024
      %27 = vsyncadd [#allocation6], %s26
      %s28 = sshll.u32 [#allocation5], 4
      %s29 = int_to_ptr.vmem [resolvable:$true] %s28
      %34 = dma.hbm_to_vmem [thread:$0]  %s1, 1024, %s29, [#allocation6], 64, 64, 4
    $region9: #{tpu_custom_call.1} parent=1 // pred_fallthru
      _
    // Predicated region
    $region10: #{tpu_custom_call.1} parent=1 // pred_check
      _
    $region11: #{tpu_custom_call.1} parent=1 // pred_check_branch
      %36 = sbr.rel (0) target = $region13
    $region12: #{tpu_custom_call.1} parent=1 // pred_region
      _
    $region13: #{tpu_custom_call.1} parent=1 // pred_fallthru
      _
    // Predicated region
    $region14: #{tpu_custom_call.1} parent=1 // pred_check
      _
    $region15: #{tpu_custom_call.1} parent=1 // pred_check_branch
      %38 = sbr.rel (0) target = $region17
    $region16: #{tpu_custom_call.1} parent=1 // pred_region
      %39 = dma.done [#allocation3], 1024
    $region17: #{tpu_custom_call.1} parent=1 // pred_fallthru
      _
    // Predicated region
    $region18: #{tpu_custom_call.1} parent=1 // pred_check
      _
    $region19: #{tpu_custom_call.1} parent=1 // pred_check_branch
      %41 = sbr.rel (0) target = $region21
    $region20: #{tpu_custom_call.1} parent=1 // pred_region
      %42 = dma.done [#allocation6], 1024
    $region21: #{tpu_custom_call.1} parent=1 // pred_fallthru
      _
    %v44 = vld [vmem:[#allocation2] sm:$0xf]
    %v45 = vld [vmem:[#allocation2 + $0x4] sm:$0xf]
    %v46 = vld [vmem:[#allocation2 + $0x8] sm:$0xf]
    %v47 = vld [vmem:[#allocation2 + $0xc] sm:$0xf]
    %v48 = vld [vmem:[#allocation2 + $0x10] sm:$0xf]
    %v49 = vld [vmem:[#allocation2 + $0x14] sm:$0xf]
    %v50 = vld [vmem:[#allocation2 + $0x18] sm:$0xf]
    %v51 = vld [vmem:[#allocation2 + $0x1c] sm:$0xf]
    %v52 = vld [vmem:[#allocation2 + $0x20] sm:$0xf]
    %v53 = vld [vmem:[#allocation2 + $0x24] sm:$0xf]
    %v54 = vld [vmem:[#allocation2 + $0x28] sm:$0xf]
    %v55 = vld [vmem:[#allocation2 + $0x2c] sm:$0xf]
    %v56 = vld [vmem:[#allocation2 + $0x30] sm:$0xf]
    %v57 = vld [vmem:[#allocation2 + $0x34] sm:$0xf]
    %v58 = vld [vmem:[#allocation2 + $0x38] sm:$0xf]
    %v59 = vld [vmem:[#allocation2 + $0x3c] sm:$0xf]
    %v60 = vld [vmem:[#allocation5] sm:$0xf]
    %v61 = vld [vmem:[#allocation5 + $0x4] sm:$0xf]
    %v62 = vld [vmem:[#allocation5 + $0x8] sm:$0xf]
    %v63 = vld [vmem:[#allocation5 + $0xc] sm:$0xf]
    %v64 = vld [vmem:[#allocation5 + $0x10] sm:$0xf]
    %v65 = vld [vmem:[#allocation5 + $0x14] sm:$0xf]
    %v66 = vld [vmem:[#allocation5 + $0x18] sm:$0xf]
    %v67 = vld [vmem:[#allocation5 + $0x1c] sm:$0xf]
    %v68 = vld [vmem:[#allocation5 + $0x20] sm:$0xf]
    %v69 = vld [vmem:[#allocation5 + $0x24] sm:$0xf]
    %v70 = vld [vmem:[#allocation5 + $0x28] sm:$0xf]
    %v71 = vld [vmem:[#allocation5 + $0x2c] sm:$0xf]
    %v72 = vld [vmem:[#allocation5 + $0x30] sm:$0xf]
    %v73 = vld [vmem:[#allocation5 + $0x34] sm:$0xf]
    %v74 = vld [vmem:[#allocation5 + $0x38] sm:$0xf]
    %v75 = vld [vmem:[#allocation5 + $0x3c] sm:$0xf]
    %v76 = vld [vmem:[%s2] sm:$0x7]
    %v77 = vlaneseq
    %v78 = vshrl.u32 %v77, 7
    %v79 = vsub.s32 0, %v78
    %v80 = vrot.slane %v76, %v79
    %v97 = vunpack.c.l.b16 %v44
    %v98 = vunpack.c.l.b16 %v45
    %v99 = vunpack.c.l.b16 %v46
    %v100 = vunpack.c.l.b16 %v47
    %v101 = vunpack.c.l.b16 %v48
    %v102 = vunpack.c.l.b16 %v49
    %v103 = vunpack.c.l.b16 %v50
    %v104 = vunpack.c.l.b16 %v51
    %v105 = vunpack.c.l.b16 %v52
    %v106 = vunpack.c.l.b16 %v53
    %v107 = vunpack.c.l.b16 %v54
    %v108 = vunpack.c.l.b16 %v55
    %v109 = vunpack.c.l.b16 %v56
    %v110 = vunpack.c.l.b16 %v57
    %v111 = vunpack.c.l.b16 %v58
    %v112 = vunpack.c.l.b16 %v59
    %v113 = vpack.c.b16 %v98, %v97
    %v114 = vpack.c.b16 %v100, %v99
    %v115 = vpack.c.b16 %v102, %v101
    %v116 = vpack.c.b16 %v104, %v103
    %v117 = vpack.c.b16 %v106, %v105
    %v118 = vpack.c.b16 %v108, %v107
    %v119 = vpack.c.b16 %v110, %v109
    %v120 = vpack.c.b16 %v112, %v111
    %v145 = vunpack.c.l.b16 %v60
    %v146 = vunpack.c.l.b16 %v61
    %v147 = vunpack.c.l.b16 %v62
    %v148 = vunpack.c.l.b16 %v63
    %v149 = vunpack.c.l.b16 %v64
    %v150 = vunpack.c.l.b16 %v65
    %v151 = vunpack.c.l.b16 %v66
    %v152 = vunpack.c.l.b16 %v67
    %v153 = vunpack.c.l.b16 %v68
    %v154 = vunpack.c.l.b16 %v69
    %v155 = vunpack.c.l.b16 %v70
    %v156 = vunpack.c.l.b16 %v71
    %v157 = vunpack.c.l.b16 %v72
    %v158 = vunpack.c.l.b16 %v73
    %v159 = vunpack.c.l.b16 %v74
    %v160 = vunpack.c.l.b16 %v75
    %v161 = vpack.c.b16 %v146, %v145
    %v162 = vpack.c.b16 %v148, %v147
    %v163 = vpack.c.b16 %v150, %v149
    %v164 = vpack.c.b16 %v152, %v151
    %v165 = vpack.c.b16 %v154, %v153
    %v166 = vpack.c.b16 %v156, %v155
    %v167 = vpack.c.b16 %v158, %v157
    %v168 = vpack.c.b16 %v160, %v159
    %177 = vmatprep.subr.bf16.mxu0 0
    %178 = vmatpush1.bf16.msra.mxu0 %v161
    %179 = vmatprep.subr.bf16.mxu0 0
    %180 = vmatpush1.bf16.msra.mxu0 %v162
    %181 = vmatprep.subr.bf16.mxu0 0
    %182 = vmatpush1.bf16.msra.mxu0 %v163
    %183 = vmatprep.subr.bf16.mxu0 0
    %184 = vmatpush1.bf16.msra.mxu0 %v164
    %185 = vmatprep.subr.bf16.mxu0 0
    %186 = vmatpush1.bf16.msra.mxu0 %v165
    %187 = vmatprep.subr.bf16.mxu0 0
    %188 = vmatpush1.bf16.msra.mxu0 %v166
    %189 = vmatprep.subr.bf16.mxu0 0
    %190 = vmatpush1.bf16.msra.mxu0 %v167
    %191 = vmatprep.subr.bf16.mxu0 0
    %192 = vmatpush1.bf16.msra.mxu0 %v168
    %193 = vmatprep.subr.bf16.mxu0 0
    %194 = vmatpush1.bf16.msra.mxu0 0
    %195 = vmatprep.subr.bf16.mxu0 0
    %196 = vmatpush1.bf16.msra.mxu0 0
    %197 = vmatprep.subr.bf16.mxu0 0
    %198 = vmatpush1.bf16.msra.mxu0 0
    %199 = vmatprep.subr.bf16.mxu0 0
    %200 = vmatpush1.bf16.msra.mxu0 0
    %201 = vmatprep.subr.bf16.mxu0 0
    %202 = vmatpush1.bf16.msra.mxu0 0
    %203 = vmatprep.subr.bf16.mxu0 0
    %204 = vmatpush1.bf16.msra.mxu0 0
    %205 = vmatprep.subr.bf16.mxu0 0
    %206 = vmatpush1.bf16.msra.mxu0 0
    %207 = vmatprep.subr.bf16.mxu0 0
    %208 = vmatpush1.bf16.msra.mxu0 0
    %209 = vmatprep.mubr.bf16.mxu0 0
    %210 = vmatmul.mubr.bf16.gmra.mrb[0].mxu0 %v113
    %v211 = vpop.f32.mrb[0].mxu0
    %v212 = vadd.f32 %v80, %v211
    %v213 = vpop.f32.mrb[0].mxu0
    %v214 = vpop.f32.mrb[0].mxu0
    %v215 = vadd.f32 %v80, %v214
    %v216 = vpop.f32.mrb[0].mxu0
    %217 = vmatprep.mubr.bf16.mxu0 0
    %218 = vmatmul.mubr.bf16.gmra.mrb[0].mxu0 %v114
    %v219 = vpop.f32.mrb[0].mxu0
    %v220 = vadd.f32 %v80, %v219
    %v221 = vpop.f32.mrb[0].mxu0
    %v222 = vpop.f32.mrb[0].mxu0
    %v223 = vadd.f32 %v80, %v222
    %v224 = vpop.f32.mrb[0].mxu0
    %225 = vmatprep.mubr.bf16.mxu0 0
    %226 = vmatmul.mubr.bf16.gmra.mrb[0].mxu0 %v115
    %v227 = vpop.f32.mrb[0].mxu0
    %v228 = vadd.f32 %v80, %v227
    %v229 = vpop.f32.mrb[0].mxu0
    %v230 = vpop.f32.mrb[0].mxu0
    %v231 = vadd.f32 %v80, %v230
    %v232 = vpop.f32.mrb[0].mxu0
    %233 = vmatprep.mubr.bf16.mxu0 0
    %234 = vmatmul.mubr.bf16.gmra.mrb[0].mxu0 %v116
    %v235 = vpop.f32.mrb[0].mxu0
    %v236 = vadd.f32 %v80, %v235
    %v237 = vpop.f32.mrb[0].mxu0
    %v238 = vpop.f32.mrb[0].mxu0
    %v239 = vadd.f32 %v80, %v238
    %v240 = vpop.f32.mrb[0].mxu0
    %241 = vmatprep.mubr.bf16.mxu0 0
    %242 = vmatmul.mubr.bf16.gmra.mrb[0].mxu0 %v117
    %v243 = vpop.f32.mrb[0].mxu0
    %v244 = vadd.f32 %v80, %v243
    %v245 = vpop.f32.mrb[0].mxu0
    %v246 = vpop.f32.mrb[0].mxu0
    %v247 = vadd.f32 %v80, %v246
    %v248 = vpop.f32.mrb[0].mxu0
    %249 = vmatprep.mubr.bf16.mxu0 0
    %250 = vmatmul.mubr.bf16.gmra.mrb[0].mxu0 %v118
    %v251 = vpop.f32.mrb[0].mxu0
    %v252 = vadd.f32 %v80, %v251
    %v253 = vpop.f32.mrb[0].mxu0
    %v254 = vpop.f32.mrb[0].mxu0
    %v255 = vadd.f32 %v80, %v254
    %v256 = vpop.f32.mrb[0].mxu0
    %257 = vmatprep.mubr.bf16.mxu0 0
    %258 = vmatmul.mubr.bf16.gmra.mrb[0].mxu0 %v119
    %v259 = vpop.f32.mrb[0].mxu0
    %v260 = vadd.f32 %v80, %v259
    %v261 = vpop.f32.mrb[0].mxu0
    %v262 = vpop.f32.mrb[0].mxu0
    %v263 = vadd.f32 %v80, %v262
    %v264 = vpop.f32.mrb[0].mxu0
    %265 = vmatprep.mubr.bf16.mxu0 0
    %266 = vmatmul.mubr.bf16.gmra.mrb[0].mxu0 %v120
    %v267 = vpop.f32.mrb[0].mxu0
    %v268 = vadd.f32 %v80, %v267
    %v269 = vpop.f32.mrb[0].mxu0
    %v270 = vpop.f32.mrb[0].mxu0
    %v271 = vadd.f32 %v80, %v270
    %v272 = vpop.f32.mrb[0].mxu0
    %273 = vdwg.mxu0
    %v274 = vlaneseq
    %v275 = vand.u32 %v274, 127
    %vm276 = vcmp.lt.s32.totalorder %v275, 32
    %v277 = vsel %vm276, 1, 0
    %v278 = vcvt.s32.f32 %v277
    %279 = vadd.xlane.f32.xlu0 %v212
    %v280 = vpop.xlane.xlu0 %279
    %281 = vadd.xlane.f32.xlu0 %v215
    %v282 = vpop.xlane.xlu0 %281
    %283 = vadd.xlane.f32.xlu0 %v220
    %v284 = vpop.xlane.xlu0 %283
    %285 = vadd.xlane.f32.xlu0 %v223
    %v286 = vpop.xlane.xlu0 %285
    %287 = vadd.xlane.f32.xlu0 %v228
    %v288 = vpop.xlane.xlu0 %287
    %289 = vadd.xlane.f32.xlu0 %v231
    %v290 = vpop.xlane.xlu0 %289
    %291 = vadd.xlane.f32.xlu0 %v236
    %v292 = vpop.xlane.xlu0 %291
    %293 = vadd.xlane.f32.xlu0 %v239
    %v294 = vpop.xlane.xlu0 %293
    %295 = vadd.xlane.f32.xlu0 %v244
    %v296 = vpop.xlane.xlu0 %295
    %297 = vadd.xlane.f32.xlu0 %v247
    %v298 = vpop.xlane.xlu0 %297
    %299 = vadd.xlane.f32.xlu0 %v252
    %v300 = vpop.xlane.xlu0 %299
    %301 = vadd.xlane.f32.xlu0 %v255
    %v302 = vpop.xlane.xlu0 %301
    %303 = vadd.xlane.f32.xlu0 %v260
    %v304 = vpop.xlane.xlu0 %303
    %305 = vadd.xlane.f32.xlu0 %v263
    %v306 = vpop.xlane.xlu0 %305
    %307 = vadd.xlane.f32.xlu0 %v268
    %v308 = vpop.xlane.xlu0 %307
    %309 = vadd.xlane.f32.xlu0 %v271
    %v310 = vpop.xlane.xlu0 %309
    %v311 = vmul.f32 %v280, 0.03125
    %v312 = vmul.f32 %v282, 0.03125
    %v313 = vmul.f32 %v284, 0.03125
    %v314 = vmul.f32 %v286, 0.03125
    %v315 = vmul.f32 %v288, 0.03125
    %v316 = vmul.f32 %v290, 0.03125
    %v317 = vmul.f32 %v292, 0.03125
    %v318 = vmul.f32 %v294, 0.03125
    %v319 = vmul.f32 %v296, 0.03125
    %v320 = vmul.f32 %v298, 0.03125
    %v321 = vmul.f32 %v300, 0.03125
    %v322 = vmul.f32 %v302, 0.03125
    %v323 = vmul.f32 %v304, 0.03125
    %v324 = vmul.f32 %v306, 0.03125
    %v325 = vmul.f32 %v308, 0.03125
    %v326 = vmul.f32 %v310, 0.03125
    %v327 = vsub.f32 %v212, %v311
    %v328 = vsub.f32 %v215, %v312
    %v329 = vsub.f32 %v220, %v313
    %v330 = vsub.f32 %v223, %v314
    %v331 = vsub.f32 %v228, %v315
    %v332 = vsub.f32 %v231, %v316
    %v333 = vsub.f32 %v236, %v317
    %v334 = vsub.f32 %v239, %v318
    %v335 = vsub.f32 %v244, %v319
    %v336 = vsub.f32 %v247, %v320
    %v337 = vsub.f32 %v252, %v321
    %v338 = vsub.f32 %v255, %v322
    %v339 = vsub.f32 %v260, %v323
    %v340 = vsub.f32 %v263, %v324
    %v341 = vsub.f32 %v268, %v325
    %v342 = vsub.f32 %v271, %v326
    %v343 = vmul.f32 %v327, %v278
    %v344 = vmul.f32 %v328, %v278
    %v345 = vmul.f32 %v329, %v278
    %v346 = vmul.f32 %v330, %v278
    %v347 = vmul.f32 %v331, %v278
    %v348 = vmul.f32 %v332, %v278
    %v349 = vmul.f32 %v333, %v278
    %v350 = vmul.f32 %v334, %v278
    %v351 = vmul.f32 %v335, %v278
    %v352 = vmul.f32 %v336, %v278
    %v353 = vmul.f32 %v337, %v278
    %v354 = vmul.f32 %v338, %v278
    %v355 = vmul.f32 %v339, %v278
    %v356 = vmul.f32 %v340, %v278
    %v357 = vmul.f32 %v341, %v278
    %v358 = vmul.f32 %v342, %v278
    %v359 = vmul.f32 %v343, %v343
    %v360 = vmul.f32 %v344, %v344
    %v361 = vmul.f32 %v345, %v345
    %v362 = vmul.f32 %v346, %v346
    %v363 = vmul.f32 %v347, %v347
    %v364 = vmul.f32 %v348, %v348
    %v365 = vmul.f32 %v349, %v349
    %v366 = vmul.f32 %v350, %v350
    %v367 = vmul.f32 %v351, %v351
    %v368 = vmul.f32 %v352, %v352
    %v369 = vmul.f32 %v353, %v353
    %v370 = vmul.f32 %v354, %v354
    %v371 = vmul.f32 %v355, %v355
    %v372 = vmul.f32 %v356, %v356
    %v373 = vmul.f32 %v357, %v357
    %v374 = vmul.f32 %v358, %v358
    %375 = vadd.xlane.f32.xlu0 %v359
    %v376 = vpop.xlane.xlu0 %375
    %377 = vadd.xlane.f32.xlu0 %v360
    %v378 = vpop.xlane.xlu0 %377
    %379 = vadd.xlane.f32.xlu0 %v361
    %v380 = vpop.xlane.xlu0 %379
    %381 = vadd.xlane.f32.xlu0 %v362
    %v382 = vpop.xlane.xlu0 %381
    %383 = vadd.xlane.f32.xlu0 %v363
    %v384 = vpop.xlane.xlu0 %383
    %385 = vadd.xlane.f32.xlu0 %v364
    %v386 = vpop.xlane.xlu0 %385
    %387 = vadd.xlane.f32.xlu0 %v365
    %v388 = vpop.xlane.xlu0 %387
    %389 = vadd.xlane.f32.xlu0 %v366
    %v390 = vpop.xlane.xlu0 %389
    %391 = vadd.xlane.f32.xlu0 %v367
    %v392 = vpop.xlane.xlu0 %391
    %393 = vadd.xlane.f32.xlu0 %v368
    %v394 = vpop.xlane.xlu0 %393
    %395 = vadd.xlane.f32.xlu0 %v369
    %v396 = vpop.xlane.xlu0 %395
    %397 = vadd.xlane.f32.xlu0 %v370
    %v398 = vpop.xlane.xlu0 %397
    %399 = vadd.xlane.f32.xlu0 %v371
    %v400 = vpop.xlane.xlu0 %399
    %401 = vadd.xlane.f32.xlu0 %v372
    %v402 = vpop.xlane.xlu0 %401
    %403 = vadd.xlane.f32.xlu0 %v373
    %v404 = vpop.xlane.xlu0 %403
    %405 = vadd.xlane.f32.xlu0 %v374
    %v406 = vpop.xlane.xlu0 %405
    %v407 = vmul.f32 %v376, 0.03125
    %v408 = vmul.f32 %v378, 0.03125
    %v409 = vmul.f32 %v380, 0.03125
    %v410 = vmul.f32 %v382, 0.03125
    %v411 = vmul.f32 %v384, 0.03125
    %v412 = vmul.f32 %v386, 0.03125
    %v413 = vmul.f32 %v388, 0.03125
    %v414 = vmul.f32 %v390, 0.03125
    %v415 = vmul.f32 %v392, 0.03125
    %v416 = vmul.f32 %v394, 0.03125
    %v417 = vmul.f32 %v396, 0.03125
    %v418 = vmul.f32 %v398, 0.03125
    %v419 = vmul.f32 %v400, 0.03125
    %v420 = vmul.f32 %v402, 0.03125
    %v421 = vmul.f32 %v404, 0.03125
    %v422 = vmul.f32 %v406, 0.03125
    %v423 = vadd.f32 %v407, 1e-05
    %v424 = vadd.f32 %v408, 1e-05
    %v425 = vadd.f32 %v409, 1e-05
    %v426 = vadd.f32 %v410, 1e-05
    %v427 = vadd.f32 %v411, 1e-05
    %v428 = vadd.f32 %v412, 1e-05
    %v429 = vadd.f32 %v413, 1e-05
    %v430 = vadd.f32 %v414, 1e-05
    %v431 = vadd.f32 %v415, 1e-05
    %v432 = vadd.f32 %v416, 1e-05
    %v433 = vadd.f32 %v417, 1e-05
    %v434 = vadd.f32 %v418, 1e-05
    %v435 = vadd.f32 %v419, 1e-05
    %v436 = vadd.f32 %v420, 1e-05
    %v437 = vadd.f32 %v421, 1e-05
    %v438 = vadd.f32 %v422, 1e-05
    %v439 = vrsqrt.pop %v423
    %v440 = vrsqrt.pop %v424
    %v441 = vrsqrt.pop %v425
    %v442 = vrsqrt.pop %v426
    %v443 = vrsqrt.pop %v427
    %v444 = vrsqrt.pop %v428
    %v445 = vrsqrt.pop %v429
    %v446 = vrsqrt.pop %v430
    %v447 = vrsqrt.pop %v431
    %v448 = vrsqrt.pop %v432
    %v449 = vrsqrt.pop %v433
    %v450 = vrsqrt.pop %v434
    %v451 = vrsqrt.pop %v435
    %v452 = vrsqrt.pop %v436
    %v453 = vrsqrt.pop %v437
    %v454 = vrsqrt.pop %v438
    %v455 = vlaneseq
    %v456 = vshrl.u32 %v455, 7
    %v457 = vsub.s32 1, %v456
    %v458 = vrot.slane %v76, %v457
    %v459 = vmul.f32 %v439, %v458
    %v460 = vmul.f32 %v440, %v458
    %v461 = vmul.f32 %v441, %v458
    %v462 = vmul.f32 %v442, %v458
    %v463 = vmul.f32 %v443, %v458
    %v464 = vmul.f32 %v444, %v458
    %v465 = vmul.f32 %v445, %v458
    %v466 = vmul.f32 %v446, %v458
    %v467 = vmul.f32 %v447, %v458
    %v468 = vmul.f32 %v448, %v458
    %v469 = vmul.f32 %v449, %v458
    %v470 = vmul.f32 %v450, %v458
    %v471 = vmul.f32 %v451, %v458
    %v472 = vmul.f32 %v452, %v458
    %v473 = vmul.f32 %v453, %v458
    %v474 = vmul.f32 %v454, %v458
    %v475 = vmul.f32 %v343, %v459
    %v476 = vmul.f32 %v344, %v460
    %v477 = vmul.f32 %v345, %v461
    %v478 = vmul.f32 %v346, %v462
    %v479 = vmul.f32 %v347, %v463
    %v480 = vmul.f32 %v348, %v464
    %v481 = vmul.f32 %v349, %v465
    %v482 = vmul.f32 %v350, %v466
    %v483 = vmul.f32 %v351, %v467
    %v484 = vmul.f32 %v352, %v468
    %v485 = vmul.f32 %v353, %v469
    %v486 = vmul.f32 %v354, %v470
    %v487 = vmul.f32 %v355, %v471
    %v488 = vmul.f32 %v356, %v472
    %v489 = vmul.f32 %v357, %v473
    %v490 = vmul.f32 %v358, %v474
    %v491 = vlaneseq
    %v492 = vshrl.u32 %v491, 7
    %v493 = vsub.s32 2, %v492
    %v494 = vrot.slane %v76, %v493
    %v495 = vadd.f32 %v475, %v494
    %v496 = vadd.f32 %v476, %v494
    %v497 = vadd.f32 %v477, %v494
    %v498 = vadd.f32 %v478, %v494
    %v499 = vadd.f32 %v479, %v494
    %v500 = vadd.f32 %v480, %v494
    %v501 = vadd.f32 %v481, %v494
    %v502 = vadd.f32 %v482, %v494
    %v503 = vadd.f32 %v483, %v494
    %v504 = vadd.f32 %v484, %v494
    %v505 = vadd.f32 %v485, %v494
    %v506 = vadd.f32 %v486, %v494
    %v507 = vadd.f32 %v487, %v494
    %v508 = vadd.f32 %v488, %v494
    %v509 = vadd.f32 %v489, %v494
    %v510 = vadd.f32 %v490, %v494
    %511 = vst [vmem:[#allocation7] sm:$0xff] %v495
    %512 = vst [vmem:[#allocation7 + $0x8] sm:$0xff] %v496
    %513 = vst [vmem:[#allocation7 + $0x10] sm:$0xff] %v497
    %514 = vst [vmem:[#allocation7 + $0x18] sm:$0xff] %v498
    %515 = vst [vmem:[#allocation7 + $0x20] sm:$0xff] %v499
    %516 = vst [vmem:[#allocation7 + $0x28] sm:$0xff] %v500
    %517 = vst [vmem:[#allocation7 + $0x30] sm:$0xff] %v501
    %518 = vst [vmem:[#allocation7 + $0x38] sm:$0xff] %v502
    %519 = vst [vmem:[#allocation7 + $0x40] sm:$0xff] %v503
    %520 = vst [vmem:[#allocation7 + $0x48] sm:$0xff] %v504
    %521 = vst [vmem:[#allocation7 + $0x50] sm:$0xff] %v505
    %522 = vst [vmem:[#allocation7 + $0x58] sm:$0xff] %v506
    %523 = vst [vmem:[#allocation7 + $0x60] sm:$0xff] %v507
    %524 = vst [vmem:[#allocation7 + $0x68] sm:$0xff] %v508
    %525 = vst [vmem:[#allocation7 + $0x70] sm:$0xff] %v509
    %526 = vst [vmem:[#allocation7 + $0x78] sm:$0xff] %v510
    // Predicated region
    $region22: #{tpu_custom_call.1} parent=1 // pred_check
      _
    $region23: #{tpu_custom_call.1} parent=1 // pred_check_branch
      %528 = sbr.rel (0) target = $region25
    $region24: #{tpu_custom_call.1} parent=1 // pred_region
      %s530 = ssub.s32 2048, 2048
      %531 = vsyncadd [#allocation4], %s530
      %s532 = sshll.u32 [#allocation7], 4
      %s533 = int_to_ptr.vmem [resolvable:$true] %s532
      %538 = dma.vmem_to_hbm [thread:$0]  %s533, 2048, %s3, [#allocation4], 128, 128, 8
    $region25: #{tpu_custom_call.1} parent=1 // pred_fallthru
      _
    // Predicated region
    $region26: #{tpu_custom_call.1} parent=1 // pred_check
      _
    $region27: #{tpu_custom_call.1} parent=1 // pred_check_branch
      %540 = sbr.rel (0) target = $region29
    $region28: #{tpu_custom_call.1} parent=1 // pred_region
      %541 = dma.done [#allocation4], 2048
    $region29: #{tpu_custom_call.1} parent=1 // pred_fallthru
      _
    %542 = vsyncpa [#allocation3], 1
    %543 = vsyncpa [#allocation6], 1
    %544 = vsyncpa [#allocation4], 1

</llo_original>
